<compile_context>
chip_gen: v5e
topology: v5e:2x2
jax: 0.10.0
libtpu: 0.0.40
codegen_flags: <defaults>
</compile_context>

<pallas_src>
import functools

import jax
import jax.numpy as jnp
from jax import lax
from jax.experimental import pallas as pl
from jax.experimental.pallas import tpu as pltpu

PAD_ID = 0


def _round_up(x, m):
    return ((x + m - 1) // m) * m


# --------------------- tiled matmul + fused bias/GELU ------------------------

def _matmul_kernel(activation, a_ref, b_ref, bias_ref, o_ref, acc_ref):
    @pl.when(pl.program_id(2) == 0)
    def _():
        acc_ref[...] = jnp.zeros_like(acc_ref)

    acc_ref[...] += jnp.dot(a_ref[...], b_ref[...],
                            preferred_element_type=jnp.float32)

    @pl.when(pl.program_id(2) == pl.num_programs(2) - 1)
    def _():
        out = acc_ref[...] + bias_ref[...]
        if activation == 'gelu':
            # TODO(synk): HF BART uses exact (erf) GELU; tanh approximation
            # used here for guaranteed Mosaic lowering.
            out = jax.nn.gelu(out)
        o_ref[...] = out.astype(o_ref.dtype)


def pl_matmul_bias(a, b, bias=None, activation=None, out_dtype=jnp.float32,
                   tm=512, tn=512, tk=512):
    """(M, K) @ (K, N) + bias, bf16 MXU inputs, f32 accumulate.

    Tiled grid (M//tm, N//tn, K//tk) with a resident f32 accumulator; bias add
    (and optional GELU) fused into the epilogue.  `out_dtype=bf16` for
    intermediate activations halves write/read bytes.  512^3 tiles keep the
    double-buffered footprint ~5 MiB (safe for v7x's 32 MiB scoped VMEM).
    """
    M, K = a.shape
    K2, N = b.shape
    assert K == K2
    if bias is None:
        bias = jnp.zeros((N,), jnp.float32)
    bias = bias.reshape(1, N).astype(jnp.float32)

    tm = min(tm, _round_up(M, 8))
    tn = min(tn, _round_up(N, 128))
    tk = min(tk, _round_up(K, 128))
    Mp, Np, Kp = _round_up(M, tm), _round_up(N, tn), _round_up(K, tk)

    a = a.astype(jnp.bfloat16)
    b = b.astype(jnp.bfloat16)
    if (Mp, Kp) != (M, K):
        a = jnp.pad(a, ((0, Mp - M), (0, Kp - K)))
    if (Kp, Np) != (K, N):
        b = jnp.pad(b, ((0, Kp - K), (0, Np - N)))
    if Np != N:
        bias = jnp.pad(bias, ((0, 0), (0, Np - N)))

    out = pl.pallas_call(
        functools.partial(_matmul_kernel, activation),
        out_shape=jax.ShapeDtypeStruct((Mp, Np), out_dtype),
        grid=(Mp // tm, Np // tn, Kp // tk),
        in_specs=[
            pl.BlockSpec((tm, tk), lambda i, j, k: (i, k)),
            pl.BlockSpec((tk, tn), lambda i, j, k: (k, j)),
            pl.BlockSpec((1, tn), lambda i, j, k: (0, j)),
        ],
        out_specs=pl.BlockSpec((tm, tn), lambda i, j, k: (i, j)),
        scratch_shapes=[pltpu.VMEM((tm, tn), jnp.float32)],
        compiler_params=pltpu.CompilerParams(
            dimension_semantics=("parallel", "parallel", "arbitrary")),
    )(a, b, bias)

    if (Mp, Np) != (M, N):
        out = out[:M, :N]
    return out


# ------------------------- fused multi-head attention ------------------------

def _attn_kernel(scale, causal, H, dh, q_ref, k_ref, v_ref, kmask_ref, o_ref):
    q = q_ref[0]                       # (Sq, D) bf16
    k = k_ref[0]                       # (Skv, D) bf16
    v = v_ref[0]                       # (Skv, D) bf16
    kmask = kmask_ref[0]               # (1, Skv) f32
    Sq, Skv = q.shape[0], k.shape[0]

    # additive key-padding (+ causal) bias, built once per row, shared by heads
    bias = (1.0 - kmask) * -1e9                          # (1, Skv) f32
    if causal:
        row = lax.broadcasted_iota(jnp.int32, (Sq, Skv), 0)
        col = lax.broadcasted_iota(jnp.int32, (Sq, Skv), 1)
        bias = bias + jnp.where(col <= row, 0.0, -1e9)   # (Sq, Skv) f32

    # TODO(synk): for very long Skv on v7x, add a Skv grid axis with online
    # (flash-style) softmax; here the head loop keeps only one head's
    # (Sq, Skv) score tile live at a time.
    outs = []
    for h in range(H):
        sl = slice(h * dh, (h + 1) * dh)
        qh = q[:, sl] * scale                            # scale fused into q
        kh = k[:, sl]
        vh = v[:, sl]
        s = lax.dot_general(qh, kh, (((1,), (1,)), ((), ())),
                            preferred_element_type=jnp.float32)  # (Sq, Skv)
        s = s + bias
        m = jnp.max(s, axis=-1, keepdims=True)
        p = jnp.exp(s - m)
        denom = jnp.maximum(jnp.sum(p, axis=-1, keepdims=True), 1e-30)
        p = p * pl.reciprocal(denom, approx=True)        # EUP divide
        outs.append(lax.dot_general(p.astype(jnp.bfloat16), vh,
                                    (((1,), (0,)), ((), ())),
                                    preferred_element_type=jnp.float32))
    o_ref[0] = jnp.concatenate(outs, axis=-1).astype(o_ref.dtype)


def pl_attention(q, k, v, key_mask, scale, H, causal=False, kv_group=1):
    """q: (N, Sq, D); k/v: (Nkv, Skv, D); key_mask: (Nkv, 1, Skv).

    One grid step per (batch*cand) row; heads are sliced in-kernel from the
    lane-dense D axis (no XLA transposes).  kv_group>1 makes C candidates
    reuse the same encoder K/V block via the index_map.
    """
    N, Sq, D = q.shape
    Nkv, Skv, _ = k.shape
    assert N == Nkv * kv_group
    dh = D // H
    kernel = functools.partial(_attn_kernel, float(scale), bool(causal), H, dh)
    return pl.pallas_call(
        kernel,
        out_shape=jax.ShapeDtypeStruct((N, Sq, D), jnp.bfloat16),
        grid=(N,),
        in_specs=[
            pl.BlockSpec((1, Sq, D), lambda n: (n, 0, 0)),
            pl.BlockSpec((1, Skv, D), lambda n: (n // kv_group, 0, 0)),
            pl.BlockSpec((1, Skv, D), lambda n: (n // kv_group, 0, 0)),
            pl.BlockSpec((1, 1, Skv), lambda n: (n // kv_group, 0, 0)),
        ],
        out_specs=pl.BlockSpec((1, Sq, D), lambda n: (n, 0, 0)),
        compiler_params=pltpu.CompilerParams(
            dimension_semantics=("parallel",)),
    )(q.astype(jnp.bfloat16), k.astype(jnp.bfloat16), v.astype(jnp.bfloat16),
      key_mask.astype(jnp.float32))


# ------------- fused lm_head + log_softmax + target-token gather -------------

def _score_kernel(tv, normalize, score_mode,
                  h_ref, w_ref, b_ref, ids_ref, out_ref, m_sc, l_sc, t_sc):
    vk = pl.program_id(1)

    @pl.when(vk == 0)
    def _():
        m_sc[...] = jnp.full_like(m_sc, -1e30)
        l_sc[...] = jnp.zeros_like(l_sc)
        t_sc[...] = jnp.zeros_like(t_sc)

    h = h_ref[0]                       # (R, D) bf16
    w = w_ref[...]                     # (D, tv) bf16
    b = b_ref[...]                     # (1, tv) f32 (-1e9 in vocab padding)
    s = jnp.dot(h, w, preferred_element_type=jnp.float32) + b   # (R, tv) f32

    # gather the target-token logit for ids that fall in this vocab tile
    ids = ids_ref[0]                   # (R, 1) int32
    rel = ids - vk * tv
    R = s.shape[0]
    iota = lax.broadcasted_iota(jnp.int32, (R, tv), 1)
    hit = iota == rel
    t_sc[...] += jnp.sum(jnp.where(hit, s, 0.0), axis=-1, keepdims=True)

    if normalize:
        # online logsumexp over the vocab tiles
        m_old = m_sc[...]
        m_new = jnp.maximum(m_old, jnp.max(s, axis=-1, keepdims=True))
        l_sc[...] = (l_sc[...] * jnp.exp(m_old - m_new)
                     + jnp.sum(jnp.exp(s - m_new), axis=-1, keepdims=True))
        m_sc[...] = m_new

    @pl.when(vk == pl.num_programs(1) - 1)
    def _():
        tok = t_sc[...]                                # (R, 1)
        if normalize:
            if score_mode == 'log':
                vals = tok - (m_sc[...] + jnp.log(l_sc[...]))
            else:
                vals = jnp.exp(tok - m_sc[...]) / l_sc[...]   # exact divide
        else:
            vals = tok
        out_ref[0] = vals


def pl_lmhead_score(hidden, w, bias, ids, normalize, score_mode, tv=2048):
    """hidden: (N, L, D); w: (D, V); ids: (N, L).  Returns (N, L) per-token
    (log-)probabilities (or raw logits) of the target tokens.

    Grid (NG, V//tv): candidates are packed into NG groups (NG=2 when N is
    even, giving v7x's two TensorCores a parallel axis) and the vocab axis is
    innermost, so the (D, V) lm_head is streamed from HBM only NG times
    instead of N times.  The (N, L, V) logits never touch HBM.
    """
    N, L, D = hidden.shape
    V = w.shape[1]
    Lp = _round_up(L, 8)
    tv = min(tv, _round_up(V, 128))
    Vp = _round_up(_round_up(V, 128), tv)
    NG = 2 if (N % 2 == 0 and N >= 2) else 1
    G = N // NG
    R = G * Lp

    hidden = hidden.astype(jnp.bfloat16)
    w = w.astype(jnp.bfloat16)
    b = bias.reshape(1, V).astype(jnp.float32)
    ids = ids.reshape(N, L, 1).astype(jnp.int32)
    if Vp != V:
        w = jnp.pad(w, ((0, 0), (0, Vp - V)))
        b = jnp.pad(b, ((0, 0), (0, Vp - V)), constant_values=-1e9)
    if Lp != L:
        hidden = jnp.pad(hidden, ((0, 0), (0, Lp - L), (0, 0)))
        ids = jnp.pad(ids, ((0, 0), (0, Lp - L), (0, 0)))
    hidden = hidden.reshape(NG, R, D)
    ids = ids.reshape(NG, R, 1)

    n_vtiles = Vp // tv
    w_spec = pl.BlockSpec((D, tv), lambda g, vk: (0, vk))
    if n_vtiles >= 3:
        # deeper buffering to cover the weight-stream latency
        w_spec = pl.BlockSpec((D, tv), lambda g, vk: (0, vk),
                              pipeline_mode=pl.Buffered(3))

    kernel = functools.partial(_score_kernel, tv, bool(normalize), score_mode)
    out = pl.pallas_call(
        kernel,
        out_shape=jax.ShapeDtypeStruct((NG, R, 1), jnp.float32),
        grid=(NG, n_vtiles),
        in_specs=[
            pl.BlockSpec((1, R, D), lambda g, vk: (g, 0, 0)),
            w_spec,
            pl.BlockSpec((1, tv), lambda g, vk: (0, vk)),
            pl.BlockSpec((1, R, 1), lambda g, vk: (g, 0, 0)),
        ],
        out_specs=pl.BlockSpec((1, R, 1), lambda g, vk: (g, 0, 0)),
        scratch_shapes=[pltpu.VMEM((R, 1), jnp.float32)] * 3,
        compiler_params=pltpu.CompilerParams(
            dimension_semantics=("parallel", "arbitrary")),
    )(hidden, w, b, ids)
    return out.reshape(N, Lp)[:, :L]


# ------------------------------- JAX glue -----------------------------------

def layer_norm(x, g, b, eps=1e-5):
    mu = jnp.mean(x, axis=-1, keepdims=True)
    var = jnp.mean(jnp.square(x - mu), axis=-1, keepdims=True)
    return (x - mu) * lax.rsqrt(var + eps) * g + b


def multi_head_attention(p, x_q, x_kv, key_mask, H, causal=False, kv_group=1):
    N, Sq, D = x_q.shape
    Nkv, Skv, _ = x_kv.shape
    dh = D // H
    # bf16 intermediate projections; no head transposes (heads sliced in-kernel)
    q = pl_matmul_bias(x_q.reshape(N * Sq, D), p['wq'], p['bq'],
                       out_dtype=jnp.bfloat16).reshape(N, Sq, D)
    k = pl_matmul_bias(x_kv.reshape(Nkv * Skv, D), p['wk'], p['bk'],
                       out_dtype=jnp.bfloat16).reshape(Nkv, Skv, D)
    v = pl_matmul_bias(x_kv.reshape(Nkv * Skv, D), p['wv'], p['bv'],
                       out_dtype=jnp.bfloat16).reshape(Nkv, Skv, D)
    o = pl_attention(q, k, v, key_mask, scale=1.0 / (dh ** 0.5), H=H,
                     causal=causal, kv_group=kv_group)      # (N, Sq, D) bf16
    return pl_matmul_bias(o.reshape(N * Sq, D), p['wo'], p['bo'],
                          out_dtype=jnp.bfloat16).reshape(N, Sq, D)


def feed_forward(p, x):
    N, S, D = x.shape
    h = pl_matmul_bias(x.reshape(N * S, D), p['w1'], p['b1'],
                       activation='gelu', out_dtype=jnp.bfloat16)
    h = pl_matmul_bias(h, p['w2'], p['b2'], out_dtype=jnp.bfloat16)
    return h.reshape(N, S, D)


def encoder(params, input_ids, input_mask):
    p = params['encoder']
    B, S = input_ids.shape
    x = params['shared'][input_ids] + params['pos_emb'][:S][None]
    x = layer_norm(x, p['ln_emb_g'], p['ln_emb_b'])
    h = multi_head_attention(p['self_attn'], x, x,
                             input_mask.reshape(B, 1, S), params['H'])
    x = layer_norm(x + h, p['ln1_g'], p['ln1_b'])
    h = feed_forward(p['ffn'], x)
    x = layer_norm(x + h, p['ln2_g'], p['ln2_b'])
    return x


def decoder(params, dec_ids, dec_mask, enc_hidden, enc_mask, cand_num):
    p = params['decoder']
    N, S = dec_ids.shape
    B, S_src, _ = enc_hidden.shape
    x = params['shared'][dec_ids] + params['pos_emb'][:S][None]
    x = layer_norm(x, p['ln_emb_g'], p['ln_emb_b'])
    # causal + key-padding mask built inside the attention kernel
    h = multi_head_attention(p['self_attn'], x, x,
                             dec_mask.reshape(N, 1, S), params['H'],
                             causal=True)
    x = layer_norm(x + h, p['ln1_g'], p['ln1_b'])
    # cross-attn: encoder K/V projected once per batch element and reused for
    # all cand_num candidates via index_map (no repeat_interleave).
    h = multi_head_attention(p['cross_attn'], x, enc_hidden,
                             enc_mask.reshape(B, 1, S_src), params['H'],
                             kv_group=cand_num)
    x = layer_norm(x + h, p['ln2_g'], p['ln2_b'])
    h = feed_forward(p['ffn'], x)
    x = layer_norm(x + h, p['ln3_g'], p['ln3_b'])
    return x


def brio_forward(params, text_id, candidate_id, normalize=True,
                 score_mode='log', length_penalty=1.0, require_gold=True,
                 adding=0.0):
    B, S_src = text_id.shape
    _, C, S_tgt = candidate_id.shape
    D = params['shared'].shape[1]
    V = params['lm_head'].shape[1]

    input_mask = (text_id != PAD_ID).astype(jnp.float32)
    cand_mask = (candidate_id != PAD_ID)
    cand_mask = cand_mask.at[:, :, 0].set(True)

    enc_hidden = encoder(params, text_id, input_mask)      # (B, S_src, D)

    dec_ids = candidate_id.reshape(B * C, S_tgt)
    dec_mask = cand_mask.reshape(B * C, S_tgt).astype(jnp.float32)
    dec_hidden = decoder(params, dec_ids, dec_mask, enc_hidden, input_mask, C)

    # probs: raw logits for candidate 0 only (the only slice the caller needs).
    hid0 = dec_hidden[::C]                                 # (B, S_tgt, D)
    probs = pl_matmul_bias(hid0.reshape(B * S_tgt, D), params['lm_head'],
                           params['final_logits_bias'].reshape(-1))
    probs = probs.reshape(B, S_tgt, V)

    # fused lm_head + log_softmax + token gather (logits never hit HBM);
    # tiny masked length-normalized sum stays in JAX.
    L = S_tgt - 1
    hid = dec_hidden[:, :L, :]                             # (B*C, L, D)
    cid = candidate_id[:, :, 1:].reshape(B * C, L)
    cmask = (cid != PAD_ID).astype(jnp.float32)
    vals = pl_lmhead_score(hid, params['lm_head'],
                           params['final_logits_bias'].reshape(-1),
                           cid, normalize, score_mode)     # (B*C, L)
    scores = (jnp.sum(vals * cmask, axis=-1)
              / (jnp.sum(cmask, axis=-1) + adding) ** length_penalty)
    scores = scores.reshape(B, C)

    if require_gold:
        return {'score': scores[:, 1:], 'summary_score': scores[:, 0],
                'probs': probs}
    return {'score': scores, 'probs': probs}


# ---------------------------- parameter setup --------------------------------

def init_params(key, V=128, D=32, H=4, FF=64, max_pos=16):
    ks = iter(jax.random.split(key, 64))

    def w(shape):
        return jax.random.normal(next(ks), shape, jnp.float32) * 0.02

    def zeros(*shape):
        return jnp.zeros(shape, jnp.float32)

    def ones(*shape):
        return jnp.ones(shape, jnp.float32)

    def attn():
        return {'wq': w((D, D)), 'bq': zeros(D), 'wk': w((D, D)), 'bk': zeros(D),
                'wv': w((D, D)), 'bv': zeros(D), 'wo': w((D, D)), 'bo': zeros(D)}

    def ffn():
        return {'w1': w((D, FF)), 'b1': zeros(FF),
                'w2': w((FF, D)), 'b2': zeros(D)}

    shared = w((V, D)).at[PAD_ID].set(0.0)   # nn.Embedding padding_idx row
    return {
        'H': H,
        'shared': shared,
        'pos_emb': w((max_pos, D)),
        'lm_head': w((D, V)),
        'final_logits_bias': jnp.zeros((1, V), jnp.float32),
        'encoder': {
            'ln_emb_g': ones(D), 'ln_emb_b': zeros(D),
            'self_attn': attn(), 'ln1_g': ones(D), 'ln1_b': zeros(D),
            'ffn': ffn(), 'ln2_g': ones(D), 'ln2_b': zeros(D),
        },
        'decoder': {
            'ln_emb_g': ones(D), 'ln_emb_b': zeros(D),
            'self_attn': attn(), 'ln1_g': ones(D), 'ln1_b': zeros(D),
            'cross_attn': attn(), 'ln2_g': ones(D), 'ln2_b': zeros(D),
            'ffn': ffn(), 'ln3_g': ones(D), 'ln3_b': zeros(D),
        },
    }


if __name__ == "__main__":
    V, D, H, FF = 128, 32, 4, 64
    B, C, S_src, S_tgt = 2, 3, 8, 8

    key = jax.random.PRNGKey(0)
    k_param, k_text, k_cand = jax.random.split(key, 3)

    params = init_params(k_param, V=V, D=D, H=H, FF=FF, max_pos=16)

    text_id = jax.random.randint(k_text, (B, S_src), 3, V, dtype=jnp.int32)
    text_id = text_id.at[:, 6:].set(PAD_ID)                 # trailing padding
    candidate_id = jax.random.randint(k_cand, (B, C, S_tgt), 3, V,
                                      dtype=jnp.int32)
    candidate_id = candidate_id.at[:, :, 0].set(2)          # decoder start tok
    candidate_id = candidate_id.at[:, :, 6:].set(PAD_ID)    # trailing padding

    out = brio_forward(params, text_id, candidate_id, normalize=True,
                       score_mode='log', length_penalty=1.0,
                       require_gold=True, adding=0.0)
    jax.block_until_ready(out)

    assert out['score'].shape == (B, C - 1)
    assert out['summary_score'].shape == (B,)
    assert out['probs'].shape == (B, S_tgt, V)
    print("KERNEL_OK")
</pallas_src>

<mosaic_0001>
module attributes {stable_mosaic.version = 11 : i64} {
  func.func @_matmul_kernel(%arg0: i32, %arg1: i32, %arg2: i32, %arg3: memref<16x128xbf16, #tpu.memory_space<vmem>>, %arg4: memref<128x128xbf16, #tpu.memory_space<vmem>>, %arg5: memref<1x128xf32, #tpu.memory_space<vmem>>, %arg6: memref<16x128xbf16, #tpu.memory_space<vmem>>, %arg7: memref<16x128xf32, #tpu.memory_space<vmem>>) attributes {dimension_semantics = [#tpu.dimension_semantics<parallel>, #tpu.dimension_semantics<parallel>, #tpu.dimension_semantics<arbitrary>], iteration_bounds = array<i64: 1, 1, 1>, scalar_prefetch = 0 : i64, scratch_operands = 1 : i64, tpu.core_type = #tpu.core_type<tc>, window_params = [{transform_indices = @transform_0, window_bounds = array<i64: 16, 128>}, {transform_indices = @transform_1, window_bounds = array<i64: 128, 128>}, {transform_indices = @transform_2, window_bounds = array<i64: 1, 128>}, {transform_indices = @transform_3, window_bounds = array<i64: 16, 128>}]} {
    %c0_i32 = arith.constant 0 : i32
    %0 = arith.cmpi eq, %arg2, %c0_i32 : i32
    %1 = arith.extui %0 : i1 to i32
    %c0_i32_0 = arith.constant 0 : i32
    %2 = arith.cmpi ne, %1, %c0_i32_0 : i32
    scf.if %2 {
      %cst_10 = arith.constant 0.000000e+00 : f32
      %12 = vector.broadcast %cst_10 : f32 to vector<16x128xf32>
      %c0_11 = arith.constant 0 : index
      %c0_12 = arith.constant 0 : index
      %13 = vector.load %arg7[%c0_11, %c0_12] : memref<16x128xf32, #tpu.memory_space<vmem>>, vector<16x128xf32>
      tpu.vector_store %arg7[%c0_11, %c0_12], %12 {strides = array<i32>} : memref<16x128xf32, #tpu.memory_space<vmem>>, vector<16x128xf32>,
    } else {
    }
    %c0 = arith.constant 0 : index
    %c0_1 = arith.constant 0 : index
    %3 = vector.load %arg7[%c0, %c0_1] : memref<16x128xf32, #tpu.memory_space<vmem>>, vector<16x128xf32>
    %c0_2 = arith.constant 0 : index
    %c0_3 = arith.constant 0 : index
    %4 = vector.load %arg3[%c0_2, %c0_3] : memref<16x128xbf16, #tpu.memory_space<vmem>>, vector<16x128xbf16>
    %c0_4 = arith.constant 0 : index
    %c0_5 = arith.constant 0 : index
    %5 = vector.load %arg4[%c0_4, %c0_5] : memref<128x128xbf16, #tpu.memory_space<vmem>>, vector<128x128xbf16>
    %cst = arith.constant dense<0.000000e+00> : vector<16x128xf32>
    %6 = tpu.matmul %4, %5, %cst {dimension_numbers = #tpu.dot_dimension_numbers<[1], [0], [0], [1], [0, 0, 1, 1], [], []>} : vector<16x128xbf16>, vector<128x128xbf16>, vector<16x128xf32> -> vector<16x128xf32>
    %7 = arith.addf %3, %6 : vector<16x128xf32>
    %c0_6 = arith.constant 0 : index
    %c0_7 = arith.constant 0 : index
    %8 = vector.load %arg7[%c0_6, %c0_7] : memref<16x128xf32, #tpu.memory_space<vmem>>, vector<16x128xf32>
    tpu.vector_store %arg7[%c0_6, %c0_7], %7 {strides = array<i32>} : memref<16x128xf32, #tpu.memory_space<vmem>>, vector<16x128xf32>,
    %c0_i32_8 = arith.constant 0 : i32
    %9 = arith.cmpi eq, %arg2, %c0_i32_8 : i32
    %10 = arith.extui %9 : i1 to i32
    %c0_i32_9 = arith.constant 0 : i32
    %11 = arith.cmpi ne, %10, %c0_i32_9 : i32
    scf.if %11 {
      %c0_10 = arith.constant 0 : index
      %c0_11 = arith.constant 0 : index
      %12 = vector.load %arg7[%c0_10, %c0_11] : memref<16x128xf32, #tpu.memory_space<vmem>>, vector<16x128xf32>
      %c0_12 = arith.constant 0 : index
      %c0_13 = arith.constant 0 : index
      %13 = vector.load %arg5[%c0_12, %c0_13] : memref<1x128xf32, #tpu.memory_space<vmem>>, vector<1x128xf32>
      %14 = vector.broadcast %13 : vector<1x128xf32> to vector<16x128xf32>
      %15 = arith.addf %12, %14 : vector<16x128xf32>
      %16 = arith.truncf %15 : vector<16x128xf32> to vector<16x128xbf16>
      %c0_14 = arith.constant 0 : index
      %c0_15 = arith.constant 0 : index
      %17 = vector.load %arg6[%c0_14, %c0_15] : memref<16x128xbf16, #tpu.memory_space<vmem>>, vector<16x128xbf16>
      tpu.vector_store %arg6[%c0_14, %c0_15], %16 {strides = array<i32>} : memref<16x128xbf16, #tpu.memory_space<vmem>>, vector<16x128xbf16>,
    } else {
    }
    return
  }
  func.func @transform_0(%arg0: i32, %arg1: i32, %arg2: i32) -> (i32, i32) {
    %c0_i32 = arith.constant 0 : i32
    return %arg0, %arg2 : i32, i32
  }
  func.func @transform_1(%arg0: i32, %arg1: i32, %arg2: i32) -> (i32, i32) {
    %c0_i32 = arith.constant 0 : i32
    return %arg2, %arg1 : i32, i32
  }
  func.func @transform_2(%arg0: i32, %arg1: i32, %arg2: i32) -> (i32, i32) {
    %c0_i32 = arith.constant 0 : i32
    %c0_i32_0 = arith.constant 0 : i32
    return %c0_i32, %arg1 : i32, i32
  }
  func.func @transform_3(%arg0: i32, %arg1: i32, %arg2: i32) -> (i32, i32) {
    %c0_i32 = arith.constant 0 : i32
    return %arg0, %arg1 : i32, i32
  }
}

</mosaic_0001>

<llo_original>
// kernel: tpu_custom_call.1
$region0: #{tpu_custom_call.1}
  #allocation0 [shape = 'u32[]', space=smem, size = 0x4, offset = 0x4, fixed_abs, tag = 'smem constant byte address 0x4 - core index']
  #allocation1 [shape = 'u32[72,128]{1,0:T(1,128)}', space=vmem, size = 0x9000, scoped, tag = 'internal scratch']
  #allocation2 [shape = 'f32[16,128]{1,0:T(8,128)}', space=vmem, size = 0x2000, scoped, tag = 'scratch operand']
  %s0 = inlined_call_operand.hbm [shape: bf16[16,128], index: 0, kind: input, shape index: {}]
  %s1 = inlined_call_operand.hbm [shape: bf16[128,128], index: 1, kind: input, shape index: {}]
  %s2 = inlined_call_operand.vmem [shape: f32[1,128], index: 2, kind: input, shape index: {}]
  %s3 = inlined_call_operand.hbm [shape: bf16[16,128], index: 3, kind: output, shape index: {}]
  %s4 = sld [smem:[#allocation0]]
  $region38: #{tpu_custom_call.1} parent=0
    _
  %s6 = ssub.s32 1, %s4
  %s7 = scalar_select 0, %s6, %s4
  $region1: #{tpu_custom_call.1} parent=0
    #allocation3 [shape = 'u8[4096]{0}', space=vmem, size = 0x1000, scoped, tag = 'input window, operand 0, single buffered']
    #allocation4 [shape = 's32[1]{0}', space=sflag, size = 0x4, scoped, tag = 'scoped memory for tpu_custom_call.1']
    #allocation5 [shape = 's32[1]{0}', space=sflag, size = 0x4, scoped, tag = 'scoped memory for tpu_custom_call.1']
    #allocation6 [shape = 'u8[32768]{0}', space=vmem, size = 0x8000, scoped, tag = 'input window, operand 1, single buffered']
    #allocation7 [shape = 's32[1]{0}', space=sflag, size = 0x4, scoped, tag = 'scoped memory for tpu_custom_call.1']
    #allocation8 [shape = 'u8[4096]{0}', space=vmem, size = 0x1000, scoped, tag = 'output window, operand 0, single buffered']
    %8 = vsyncpa [#allocation4], 0
    %9 = vsyncpa [#allocation7], 0
    %10 = vsyncpa [#allocation5], 0
    // Predicated region
    $region2: #{tpu_custom_call.1} parent=1 // pred_check
      _
    $region3: #{tpu_custom_call.1} parent=1 // pred_check_branch
      %12 = sbr.rel (0) target = $region5
    $region4: #{tpu_custom_call.1} parent=1 // pred_region
      %14 = vsyncadd [#allocation4], 0
      %s15 = sshll.u32 %s0, 4
      %s16 = int_to_ptr.hbm [resolvable:$true] %s15
      %s17 = sshll.u32 [#allocation3], 4
      %s18 = int_to_ptr.vmem [resolvable:$true] %s17
      %23 = dma.hbm_to_vmem [thread:$0]  %s16, 128, %s18, [#allocation4], 64, 64, 4
    $region5: #{tpu_custom_call.1} parent=1 // pred_fallthru
      _
    // Predicated region
    $region6: #{tpu_custom_call.1} parent=1 // pred_check
      _
    $region7: #{tpu_custom_call.1} parent=1 // pred_check_branch
      %25 = sbr.rel (0) target = $region9
    $region8: #{tpu_custom_call.1} parent=1 // pred_region
      %27 = vsyncadd [#allocation7], 0
      %s28 = sshll.u32 %s1, 4
      %s29 = int_to_ptr.hbm [resolvable:$true] %s28
      %s30 = sshll.u32 [#allocation6], 4
      %s31 = int_to_ptr.vmem [resolvable:$true] %s30
      %36 = dma.hbm_to_vmem [thread:$0]  %s29, 1024, %s31, [#allocation7], 64, 64, 4
    $region9: #{tpu_custom_call.1} parent=1 // pred_fallthru
      _
    // Predicated region
    $region10: #{tpu_custom_call.1} parent=1 // pred_check
      _
    $region11: #{tpu_custom_call.1} parent=1 // pred_check_branch
      %38 = sbr.rel (0) target = $region13
    $region12: #{tpu_custom_call.1} parent=1 // pred_region
      _
    $region13: #{tpu_custom_call.1} parent=1 // pred_fallthru
      _
    // Predicated region
    $region14: #{tpu_custom_call.1} parent=1 // pred_check
      _
    $region15: #{tpu_custom_call.1} parent=1 // pred_check_branch
      %40 = sbr.rel (0) target = $region17
    $region16: #{tpu_custom_call.1} parent=1 // pred_region
      %42 = dma.done [#allocation4], 128
    $region17: #{tpu_custom_call.1} parent=1 // pred_fallthru
      _
    // Predicated region
    $region18: #{tpu_custom_call.1} parent=1 // pred_check
      _
    $region19: #{tpu_custom_call.1} parent=1 // pred_check_branch
      %44 = sbr.rel (0) target = $region21
    $region20: #{tpu_custom_call.1} parent=1 // pred_region
      %46 = dma.done [#allocation7], 1024
    $region21: #{tpu_custom_call.1} parent=1 // pred_fallthru
      _
    %p47 = scmp.eq.s32.totalorder 0, 0
    // Predicated region
    $region22: #{tpu_custom_call.1} parent=1 // pred_check
      %p48 = pneg %p47
    $region23: #{tpu_custom_call.1} parent=1 // pred_check_branch
      %50 = sbr.rel (%p48) target = $region25
    $region24: #{tpu_custom_call.1} parent=1 // pred_region
      %51 = vst [vmem:[#allocation2] sm:$0xff] 0.0
      %52 = vst [vmem:[#allocation2 + $0x8] sm:$0xff] 0.0
    $region25: #{tpu_custom_call.1} parent=1 // pred_fallthru
      _
    %v53 = vld [vmem:[#allocation2] sm:$0xff]
    %v54 = vld [vmem:[#allocation2 + $0x8] sm:$0xff]
    %v55 = vld [vmem:[#allocation3] sm:$0xf]
    %v56 = vld [vmem:[#allocation3 + $0x4] sm:$0xf]
    %v57 = vld [vmem:[#allocation6] sm:$0xf]
    %v58 = vld [vmem:[#allocation6 + $0x4] sm:$0xf]
    %v59 = vld [vmem:[#allocation6 + $0x8] sm:$0xf]
    %v60 = vld [vmem:[#allocation6 + $0xc] sm:$0xf]
    %v61 = vld [vmem:[#allocation6 + $0x10] sm:$0xf]
    %v62 = vld [vmem:[#allocation6 + $0x14] sm:$0xf]
    %v63 = vld [vmem:[#allocation6 + $0x18] sm:$0xf]
    %v64 = vld [vmem:[#allocation6 + $0x1c] sm:$0xf]
    %v65 = vld [vmem:[#allocation6 + $0x20] sm:$0xf]
    %v66 = vld [vmem:[#allocation6 + $0x24] sm:$0xf]
    %v67 = vld [vmem:[#allocation6 + $0x28] sm:$0xf]
    %v68 = vld [vmem:[#allocation6 + $0x2c] sm:$0xf]
    %v69 = vld [vmem:[#allocation6 + $0x30] sm:$0xf]
    %v70 = vld [vmem:[#allocation6 + $0x34] sm:$0xf]
    %v71 = vld [vmem:[#allocation6 + $0x38] sm:$0xf]
    %v72 = vld [vmem:[#allocation6 + $0x3c] sm:$0xf]
    %v75 = vunpack.c.l.b16 %v55
    %v76 = vunpack.c.l.b16 %v56
    %v77 = vpack.c.b16 %v76, %v75
    %v95 = vunpack.c.l.b16 %v57
    %v96 = vunpack.c.l.b16 %v58
    %v97 = vunpack.c.l.b16 %v59
    %v98 = vunpack.c.l.b16 %v60
    %v99 = vunpack.c.l.b16 %v61
    %v100 = vunpack.c.l.b16 %v62
    %v101 = vunpack.c.l.b16 %v63
    %v102 = vunpack.c.l.b16 %v64
    %v103 = vunpack.c.l.b16 %v65
    %v104 = vunpack.c.l.b16 %v66
    %v105 = vunpack.c.l.b16 %v67
    %v106 = vunpack.c.l.b16 %v68
    %v107 = vunpack.c.l.b16 %v69
    %v108 = vunpack.c.l.b16 %v70
    %v109 = vunpack.c.l.b16 %v71
    %v110 = vunpack.c.l.b16 %v72
    %v111 = vpack.c.b16 %v96, %v95
    %v112 = vpack.c.b16 %v98, %v97
    %v113 = vpack.c.b16 %v100, %v99
    %v114 = vpack.c.b16 %v102, %v101
    %v115 = vpack.c.b16 %v104, %v103
    %v116 = vpack.c.b16 %v106, %v105
    %v117 = vpack.c.b16 %v108, %v107
    %v118 = vpack.c.b16 %v110, %v109
    %127 = vmatpush.bf16.msra.mxu0 %v118
    %128 = vmatpush.bf16.msra.mxu0 %v117
    %129 = vmatpush.bf16.msra.mxu0 %v116
    %130 = vmatpush.bf16.msra.mxu0 %v115
    %131 = vmatpush.bf16.msra.mxu0 %v114
    %132 = vmatpush.bf16.msra.mxu0 %v113
    %133 = vmatpush.bf16.msra.mxu0 %v112
    %134 = vmatpush.bf16.msra.mxu0 %v111
    %135 = vmatmul.bf16.gmra.mxu0 %v77
    %v136 = vpop.f32.mrf.mxu0
    %v137 = vadd.f32 0.0, %v136
    %v138 = vpop.f32.mrf.mxu0
    %v139 = vadd.f32 0.0, %v138
    %140 = vdwg.mxu0
    %v141 = vadd.f32 %v53, %v137
    %v142 = vadd.f32 %v54, %v139
    %143 = vst [vmem:[#allocation2] sm:$0xff] %v141
    %144 = vst [vmem:[#allocation2 + $0x8] sm:$0xff] %v142
    // Predicated region
    $region26: #{tpu_custom_call.1} parent=1 // pred_check
      %p145 = pneg %p47
    $region27: #{tpu_custom_call.1} parent=1 // pred_check_branch
      %147 = sbr.rel (%p145) target = $region29
    $region28: #{tpu_custom_call.1} parent=1 // pred_region
      %v148 = vld [vmem:[#allocation2] sm:$0xff]
      %v149 = vld [vmem:[#allocation2 + $0x8] sm:$0xff]
      %v150 = vld [vmem:[%s2] sm:$0x1]
      %v152 = vperm.slane %v150, 0
      %v154 = vadd.f32 %v148, %v152
      %v155 = vadd.f32 %v149, %v152
      %v156 = vpack.c.bf16 %v154, %v154
      %v157 = vpack.c.bf16 %v155, %v155
      %158 = vst [vmem:[#allocation8] sm:$0xf] %v156
      %159 = vst [vmem:[#allocation8 + $0x4] sm:$0xf] %v157
    $region29: #{tpu_custom_call.1} parent=1 // pred_fallthru
      _
    // Predicated region
    $region30: #{tpu_custom_call.1} parent=1 // pred_check
      _
    $region31: #{tpu_custom_call.1} parent=1 // pred_check_branch
      %161 = sbr.rel (0) target = $region33
    $region32: #{tpu_custom_call.1} parent=1 // pred_region
      %163 = vsyncadd [#allocation5], 0
      %s164 = sshll.u32 [#allocation8], 4
      %s165 = int_to_ptr.vmem [resolvable:$true] %s164
      %s166 = sshll.u32 %s3, 4
      %s167 = int_to_ptr.hbm [resolvable:$true] %s166
      %172 = dma.vmem_to_hbm [thread:$0]  %s165, 128, %s167, [#allocation5], 64, 64, 4
    $region33: #{tpu_custom_call.1} parent=1 // pred_fallthru
      _
    // Predicated region
    $region34: #{tpu_custom_call.1} parent=1 // pred_check
      _
    $region35: #{tpu_custom_call.1} parent=1 // pred_check_branch
      %174 = sbr.rel (0) target = $region37
    $region36: #{tpu_custom_call.1} parent=1 // pred_region
      %176 = dma.done [#allocation5], 128
    $region37: #{tpu_custom_call.1} parent=1 // pred_fallthru
      _
    %177 = vsyncpa [#allocation4], 1
    %178 = vsyncpa [#allocation7], 1
    %179 = vsyncpa [#allocation5], 1

</llo_original>
